<compile_context>
chip_gen: v7x
topology: tpu7x:2x2x1
jax: 0.10.0
libtpu: 0.0.40
codegen_flags: <defaults>
</compile_context>

<pallas_src>
import functools

import numpy as np

import jax
import jax.numpy as jnp
from jax import lax
from jax.experimental import pallas as pl
from jax.experimental.pallas import tpu as pltpu

# canonical order of capturable modules in the concrete net
NODE_NAMES = ("layer1.conv", "layer1.relu", "layer2.conv", "layer2.relu")


def _fused_net_kernel(x_ref, w1_ref, b1_ref, w2_ref, b2_ref, *out_refs,
                      emit, N, H):
    """Fused layer1.conv -> relu -> layer2.conv (-> relu) for the whole batch.

    x_ref : (N*H, W*Cin)          lane-dense input (lane index = w*Cin + ci)
    w1_ref: (3, W*Cin, W*Cmid)    banded weights (one (kh) slab per vertical tap;
                                  kw taps + horizontal zero padding folded in)
    b1_ref: (1, W*Cmid)           bias tiled to the lane-dense layout
    w2_ref: (3, W*Cmid, W*Cout)
    b2_ref: (1, W*Cout)
    out_refs: emitted features, each (N*H, W*C) lane-dense.
    """
    NH = N * H
    # per-row image height index (rows are n*H + h): used to zero the vertical halo.
    # Masking invalid h also neutralizes cross-batch rows introduced by the roll.
    h_idx = lax.broadcasted_iota(jnp.int32, (NH, 1), 0) % H

    def conv3x3(inp, w_ref, b_ref):
        # center tap (kh=1): no shift, no mask
        acc = jnp.dot(inp, w_ref[1], preferred_element_type=jnp.float32)
        for kh in (0, 2):
            # output row r needs input row r + (kh-1)  ->  roll by (1-kh) sublanes
            xs = pltpu.roll(inp, shift=(1 - kh) % NH, axis=0)
            valid = (h_idx >= 1) if kh == 0 else (h_idx <= H - 2)
            xs = jnp.where(valid, xs, 0.0)
            acc = acc + jnp.dot(xs, w_ref[kh], preferred_element_type=jnp.float32)
        return acc + b_ref[...]

    conv1 = conv3x3(x_ref[...], w1_ref, b1_ref)      # (NH, W*Cmid)
    relu1 = jnp.maximum(conv1, 0.0)                  # stays in registers/VMEM
    conv2 = conv3x3(relu1, w2_ref, b2_ref)           # (NH, W*Cout)

    feats = (conv1, relu1, conv2)
    idx = 0
    for node in range(3):
        if emit[node]:
            out_refs[idx][...] = feats[node].astype(out_refs[idx].dtype)
            idx += 1
    if emit[3]:  # layer2.relu
        out_refs[idx][...] = jnp.maximum(conv2, 0.0).astype(out_refs[idx].dtype)


def _banded_conv_weights(w_oihw, W):
    """OIHW (Cout,Cin,3,3) conv weight -> (3, W*Cin, W*Cout) banded matrices.

    B[kh, w'*Cin+ci, w*Cout+co] = w[co,ci,kh,kw] where w' = w + kw - 1 (in range),
    so a single matmul against B[kh] applies all three kw taps of row (h+kh-1) with
    'SAME' zero padding at the left/right image edges built in.
    Built on the host with numpy ONCE per extractor (not inside jit).
    """
    w = np.asarray(w_oihw, dtype=np.float32)       # (Cout, Cin, 3, 3)
    w_hw = np.transpose(w, (2, 3, 1, 0))           # (kh, kw, Cin, Cout)
    c_in, c_out = w_hw.shape[2], w_hw.shape[3]
    banded = np.zeros((3, W * c_in, W * c_out), np.float32)
    for kh in range(3):
        for kw in range(3):
            shift_eye = np.eye(W, k=1 - kw, dtype=np.float32)   # S[w', w]=1 iff w'=w+kw-1
            banded[kh] += np.kron(shift_eye, w_hw[kh, kw])
    return jnp.asarray(banded)


def _tiled_bias(b, W):
    """(C,) bias -> (1, W*C) lane-dense bias row."""
    return jnp.asarray(np.tile(np.asarray(b, dtype=np.float32), W).reshape(1, -1))


@functools.partial(jax.jit, static_argnames=("emit",))
def _fused_forward(x_nchw, w1_banded, b1_tiled, w2_banded, b2_tiled, *, emit):
    """Runs the whole small net in one (grid-less) pallas_call; returns emitted NCHW features."""
    N, Cin, H, W = x_nchw.shape
    Cmid = b1_tiled.shape[1] // W
    Cout = b2_tiled.shape[1] // W

    # single NCHW -> lane-dense (N*H, W*Cin) layout change for the whole net
    x2d = jnp.transpose(x_nchw, (0, 2, 3, 1)).reshape(N * H, W * Cin)

    node_channels = (Cmid, Cmid, Cout, Cout)
    emit_channels = tuple(c for c, e in zip(node_channels, emit) if e)

    kernel = functools.partial(_fused_net_kernel, emit=emit, N=N, H=H)

    # lane-dense outputs: (N*H, W*C); with W=16, C=8 the last dim is exactly 128
    out_shapes = tuple(jax.ShapeDtypeStruct((N * H, W * c), x_nchw.dtype)
                       for c in emit_channels)

    # No grid: whole problem fits one step (M = N*H = 32 rows), so the serial
    # grid loop / per-step launch overhead is gone on single-TC chips.
    result = pl.pallas_call(kernel, out_shape=out_shapes)(
        x2d, w1_banded, b1_tiled, w2_banded, b2_tiled)
    if not isinstance(result, (tuple, list)):
        result = (result,)

    # lane-dense (N*H, W*C) -> NCHW (PyTorch hook-output convention)
    feats = tuple(
        jnp.transpose(o.reshape(N, H, W, c), (0, 3, 1, 2))
        for o, c in zip(result, emit_channels)
    )
    return feats


class SmallNetParams:
    """Deterministic parameters for the concrete net wrapped by IntermediateOutputs."""

    def __init__(self, key, c_in=4, c_mid=8, c_out=8, dtype=jnp.float32):
        k1, k2, k3, k4 = jax.random.split(key, 4)
        self.w1 = 0.1 * jax.random.normal(k1, (c_mid, c_in, 3, 3), dtype)   # layer1.conv.weight
        self.b1 = 0.1 * jax.random.normal(k2, (c_mid,), dtype)              # layer1.conv.bias
        self.w2 = 0.1 * jax.random.normal(k3, (c_out, c_mid, 3, 3), dtype)  # layer2.conv.weight
        self.b2 = 0.1 * jax.random.normal(k4, (c_out,), dtype)              # layer2.conv.bias


class IntermediateOutputsPallas:
    """JAX/Pallas analogue of IntermediateOutputs(net, return_nodes).

    Runs the full net on every forward call (single fused Pallas kernel) and returns
    the intermediate outputs named in `return_nodes`, in NCHW (matching PyTorch hooks).
    """

    NODE_NAMES = NODE_NAMES

    def __init__(self, params: SmallNetParams, return_nodes, requires_grad=False):
        # TODO(synk): requires_grad / forward-hook registration are PyTorch autograd &
        # Python plumbing with no Pallas equivalent; capture is done by statically
        # selecting which kernel outputs to emit.
        del requires_grad
        self._return_tensor = False
        if isinstance(return_nodes, list):
            return_nodes = {k: str(i) for i, k in enumerate(return_nodes)}
        elif not isinstance(return_nodes, dict):
            return_nodes = {return_nodes: "_"}
            self._return_tensor = True
        for name in return_nodes:
            if name not in self.NODE_NAMES:
                raise Exception(f"unknown module name: {name}")
        self.return_nodes = return_nodes
        self.params = params
        self._emit = tuple(name in return_nodes for name in self.NODE_NAMES)
        self._prep_cache = {}   # width -> (w1_banded, b1_tiled, w2_banded, b2_tiled)

    def _prepare(self, W):
        if W not in self._prep_cache:
            p = self.params
            self._prep_cache[W] = (
                _banded_conv_weights(p.w1, W), _tiled_bias(p.b1, W),
                _banded_conv_weights(p.w2, W), _tiled_bias(p.b2, W),
            )
        return self._prep_cache[W]

    def __call__(self, x_nchw):
        W = x_nchw.shape[3]
        w1b, b1t, w2b, b2t = self._prepare(W)
        feats = _fused_forward(x_nchw, w1b, b1t, w2b, b2t, emit=self._emit)
        emitted_names = [n for n, e in zip(self.NODE_NAMES, self._emit) if e]
        captured = dict(zip(emitted_names, feats))
        outputs = {out_name: captured[mod_name]
                   for mod_name, out_name in self.return_nodes.items()}
        if self._return_tensor:
            return outputs["_"]
        return outputs


def _reference_conv3x3(x_nchw, w, b):
    """Pure-JAX reference (NCHW) for correctness checking."""
    return jax.lax.conv_general_dilated(
        x_nchw, w, window_strides=(1, 1), padding="SAME",
        dimension_numbers=("NCHW", "OIHW", "NCHW"),
    ) + b.reshape(1, -1, 1, 1)


if __name__ == "__main__":
    key = jax.random.PRNGKey(0)
    kx, kp = jax.random.split(key)

    # Input in PyTorch NCHW convention.
    x = jax.random.normal(kx, (2, 4, 16, 16), jnp.float32)
    params = SmallNetParams(kp)

    # dict-style return_nodes
    extractor = IntermediateOutputsPallas(
        params, return_nodes={"layer1.conv": "feat1", "layer2.conv": "feat2"}
    )
    outs = extractor(x)
    outs = jax.tree_util.tree_map(jax.block_until_ready, outs)

    # Correctness vs pure-JAX reference.
    ref1 = _reference_conv3x3(x, params.w1, params.b1)
    ref2 = _reference_conv3x3(jnp.maximum(ref1, 0.0), params.w2, params.b2)

    assert outs["feat1"].shape == (2, 8, 16, 16)
    assert outs["feat2"].shape == (2, 8, 16, 16)
    assert jnp.allclose(outs["feat1"], ref1, atol=1e-4, rtol=1e-4)
    assert jnp.allclose(outs["feat2"], ref2, atol=1e-4, rtol=1e-4)

    # list-style return_nodes (relu nodes emitted directly by the kernel)
    relu_outs = IntermediateOutputsPallas(params, ["layer1.relu", "layer2.relu"])(x)
    relu_outs = jax.tree_util.tree_map(jax.block_until_ready, relu_outs)
    assert jnp.allclose(relu_outs["0"], jnp.maximum(ref1, 0.0), atol=1e-4, rtol=1e-4)
    assert jnp.allclose(relu_outs["1"], jnp.maximum(ref2, 0.0), atol=1e-4, rtol=1e-4)

    # single-string return_nodes path (returns a bare tensor)
    single = IntermediateOutputsPallas(params, "layer1.conv")(x)
    jax.block_until_ready(single)
    assert single.shape == (2, 8, 16, 16)
    assert jnp.allclose(single, ref1, atol=1e-4, rtol=1e-4)

    print("KERNEL_OK")
</pallas_src>

<mosaic_0001>
module attributes {stable_mosaic.version = 11 : i64} {
  func.func @_fused_net_kernel(%arg0: memref<32x64xf32, #tpu.memory_space<vmem>>, %arg1: memref<3x64x128xf32, #tpu.memory_space<vmem>>, %arg2: memref<1x128xf32, #tpu.memory_space<vmem>>, %arg3: memref<3x128x128xf32, #tpu.memory_space<vmem>>, %arg4: memref<1x128xf32, #tpu.memory_space<vmem>>, %arg5: memref<32x128xf32, #tpu.memory_space<vmem>>, %arg6: memref<32x128xf32, #tpu.memory_space<vmem>>) attributes {dimension_semantics = [], scalar_prefetch = 0 : i64, scratch_operands = 0 : i64, tpu.core_type = #tpu.core_type<tc>} {
    %0 = tpu.iota {dimensions = array<i32: 0>} : vector<32x1xi32>
    %c16_i32 = arith.constant 16 : i32
    %c0_i32 = arith.constant 0 : i32
    %1 = arith.cmpi eq, %c16_i32, %c0_i32 : i32
    %c1_i32 = arith.constant 1 : i32
    %2 = arith.select %1, %c1_i32, %c16_i32 : i32
    %3 = vector.broadcast %2 : i32 to vector<32x1xi32>
    %4 = arith.remsi %0, %3 : vector<32x1xi32>
    %c0_i32_0 = arith.constant 0 : i32
    %5 = vector.broadcast %c0_i32_0 : i32 to vector<32x1xi32>
    %6 = arith.cmpi ne, %4, %5 : vector<32x1xi32>
    %c0_i32_1 = arith.constant 0 : i32
    %7 = vector.broadcast %c0_i32_1 : i32 to vector<32x1xi32>
    %8 = arith.cmpi slt, %4, %7 : vector<32x1xi32>
    %c0_i32_2 = arith.constant 0 : i32
    %9 = arith.cmpi slt, %2, %c0_i32_2 : i32
    %10 = vector.broadcast %9 : i1 to vector<32x1xi1>
    %11 = vector.broadcast %10 : vector<32x1xi1> to vector<32x1xi1>
    %12 = arith.xori %8, %11 : vector<32x1xi1>
    %13 = arith.andi %12, %6 : vector<32x1xi1>
    %14 = vector.broadcast %2 : i32 to vector<32x1xi32>
    %15 = arith.addi %4, %14 : vector<32x1xi32>
    %16 = arith.select %13, %15, %4 : vector<32x1xi1>, vector<32x1xi32>
    %c0 = arith.constant 0 : index
    %c0_3 = arith.constant 0 : index
    %17 = vector.load %arg0[%c0, %c0_3] : memref<32x64xf32, #tpu.memory_space<vmem>>, vector<32x64xf32>
    %c1 = arith.constant 1 : index
    %c0_4 = arith.constant 0 : index
    %c0_5 = arith.constant 0 : index
    %18 = vector.load %arg1[%c1, %c0_4, %c0_5] : memref<3x64x128xf32, #tpu.memory_space<vmem>>, vector<1x64x128xf32>
    %19 = vector.shape_cast %18 : vector<1x64x128xf32> to vector<64x128xf32>
    %cst = arith.constant dense<0.000000e+00> : vector<32x128xf32>
    %20 = tpu.matmul %17, %19, %cst {dimension_numbers = #tpu.dot_dimension_numbers<[1], [0], [0], [1], [0, 0, 1, 1], [], []>} : vector<32x64xf32>, vector<64x128xf32>, vector<32x128xf32> -> vector<32x128xf32>
    %c1_i32_6 = arith.constant 1 : i32
    %21 = tpu.dynamic_rotate %17 by %c1_i32_6 dim 0 : vector<32x64xf32>, i32 -> vector<32x64xf32>
    %c1_i32_7 = arith.constant 1 : i32
    %22 = vector.broadcast %c1_i32_7 : i32 to vector<32x1xi32>
    %23 = arith.cmpi sge, %16, %22 : vector<32x1xi32>
    %cst_8 = arith.constant 0.000000e+00 : f32
    %24 = vector.shape_cast %23 : vector<32x1xi1> to vector<32x1xi1>
    %25 = vector.broadcast %24 : vector<32x1xi1> to vector<32x64xi1>
    %26 = vector.broadcast %cst_8 : f32 to vector<32x64xf32>
    %27 = arith.select %25, %21, %26 : vector<32x64xi1>, vector<32x64xf32>
    %c0_9 = arith.constant 0 : index
    %c0_10 = arith.constant 0 : index
    %c0_11 = arith.constant 0 : index
    %28 = vector.load %arg1[%c0_9, %c0_10, %c0_11] : memref<3x64x128xf32, #tpu.memory_space<vmem>>, vector<1x64x128xf32>
    %29 = vector.shape_cast %28 : vector<1x64x128xf32> to vector<64x128xf32>
    %cst_12 = arith.constant dense<0.000000e+00> : vector<32x128xf32>
    %30 = tpu.matmul %27, %29, %cst_12 {dimension_numbers = #tpu.dot_dimension_numbers<[1], [0], [0], [1], [0, 0, 1, 1], [], []>} : vector<32x64xf32>, vector<64x128xf32>, vector<32x128xf32> -> vector<32x128xf32>
    %31 = arith.addf %20, %30 : vector<32x128xf32>
    %c31_i32 = arith.constant 31 : i32
    %32 = tpu.dynamic_rotate %17 by %c31_i32 dim 0 : vector<32x64xf32>, i32 -> vector<32x64xf32>
    %c14_i32 = arith.constant 14 : i32
    %33 = vector.broadcast %c14_i32 : i32 to vector<32x1xi32>
    %34 = arith.cmpi sle, %16, %33 : vector<32x1xi32>
    %cst_13 = arith.constant 0.000000e+00 : f32
    %35 = vector.shape_cast %34 : vector<32x1xi1> to vector<32x1xi1>
    %36 = vector.broadcast %35 : vector<32x1xi1> to vector<32x64xi1>
    %37 = vector.broadcast %cst_13 : f32 to vector<32x64xf32>
    %38 = arith.select %36, %32, %37 : vector<32x64xi1>, vector<32x64xf32>
    %c2 = arith.constant 2 : index
    %c0_14 = arith.constant 0 : index
    %c0_15 = arith.constant 0 : index
    %39 = vector.load %arg1[%c2, %c0_14, %c0_15] : memref<3x64x128xf32, #tpu.memory_space<vmem>>, vector<1x64x128xf32>
    %40 = vector.shape_cast %39 : vector<1x64x128xf32> to vector<64x128xf32>
    %cst_16 = arith.constant dense<0.000000e+00> : vector<32x128xf32>
    %41 = tpu.matmul %38, %40, %cst_16 {dimension_numbers = #tpu.dot_dimension_numbers<[1], [0], [0], [1], [0, 0, 1, 1], [], []>} : vector<32x64xf32>, vector<64x128xf32>, vector<32x128xf32> -> vector<32x128xf32>
    %42 = arith.addf %31, %41 : vector<32x128xf32>
    %c0_17 = arith.constant 0 : index
    %c0_18 = arith.constant 0 : index
    %43 = vector.load %arg2[%c0_17, %c0_18] : memref<1x128xf32, #tpu.memory_space<vmem>>, vector<1x128xf32>
    %44 = vector.broadcast %43 : vector<1x128xf32> to vector<32x128xf32>
    %45 = arith.addf %42, %44 : vector<32x128xf32>
    %cst_19 = arith.constant 0.000000e+00 : f32
    %46 = vector.broadcast %cst_19 : f32 to vector<32x128xf32>
    %47 = arith.maximumf %45, %46 : vector<32x128xf32>
    %c1_20 = arith.constant 1 : index
    %c0_21 = arith.constant 0 : index
    %c0_22 = arith.constant 0 : index
    %48 = vector.load %arg3[%c1_20, %c0_21, %c0_22] : memref<3x128x128xf32, #tpu.memory_space<vmem>>, vector<1x128x128xf32>
    %49 = vector.shape_cast %48 : vector<1x128x128xf32> to vector<128x128xf32>
    %cst_23 = arith.constant dense<0.000000e+00> : vector<32x128xf32>
    %50 = tpu.matmul %47, %49, %cst_23 {dimension_numbers = #tpu.dot_dimension_numbers<[1], [0], [0], [1], [0, 0, 1, 1], [], []>} : vector<32x128xf32>, vector<128x128xf32>, vector<32x128xf32> -> vector<32x128xf32>
    %c1_i32_24 = arith.constant 1 : i32
    %51 = tpu.dynamic_rotate %47 by %c1_i32_24 dim 0 : vector<32x128xf32>, i32 -> vector<32x128xf32>
    %c1_i32_25 = arith.constant 1 : i32
    %52 = vector.broadcast %c1_i32_25 : i32 to vector<32x1xi32>
    %53 = arith.cmpi sge, %16, %52 : vector<32x1xi32>
    %cst_26 = arith.constant 0.000000e+00 : f32
    %54 = vector.shape_cast %53 : vector<32x1xi1> to vector<32x1xi1>
    %55 = vector.broadcast %54 : vector<32x1xi1> to vector<32x128xi1>
    %56 = vector.broadcast %cst_26 : f32 to vector<32x128xf32>
    %57 = arith.select %55, %51, %56 : vector<32x128xi1>, vector<32x128xf32>
    %c0_27 = arith.constant 0 : index
    %c0_28 = arith.constant 0 : index
    %c0_29 = arith.constant 0 : index
    %58 = vector.load %arg3[%c0_27, %c0_28, %c0_29] : memref<3x128x128xf32, #tpu.memory_space<vmem>>, vector<1x128x128xf32>
    %59 = vector.shape_cast %58 : vector<1x128x128xf32> to vector<128x128xf32>
    %cst_30 = arith.constant dense<0.000000e+00> : vector<32x128xf32>
    %60 = tpu.matmul %57, %59, %cst_30 {dimension_numbers = #tpu.dot_dimension_numbers<[1], [0], [0], [1], [0, 0, 1, 1], [], []>} : vector<32x128xf32>, vector<128x128xf32>, vector<32x128xf32> -> vector<32x128xf32>
    %61 = arith.addf %50, %60 : vector<32x128xf32>
    %c31_i32_31 = arith.constant 31 : i32
    %62 = tpu.dynamic_rotate %47 by %c31_i32_31 dim 0 : vector<32x128xf32>, i32 -> vector<32x128xf32>
    %c14_i32_32 = arith.constant 14 : i32
    %63 = vector.broadcast %c14_i32_32 : i32 to vector<32x1xi32>
    %64 = arith.cmpi sle, %16, %63 : vector<32x1xi32>
    %cst_33 = arith.constant 0.000000e+00 : f32
    %65 = vector.shape_cast %64 : vector<32x1xi1> to vector<32x1xi1>
    %66 = vector.broadcast %65 : vector<32x1xi1> to vector<32x128xi1>
    %67 = vector.broadcast %cst_33 : f32 to vector<32x128xf32>
    %68 = arith.select %66, %62, %67 : vector<32x128xi1>, vector<32x128xf32>
    %c2_34 = arith.constant 2 : index
    %c0_35 = arith.constant 0 : index
    %c0_36 = arith.constant 0 : index
    %69 = vector.load %arg3[%c2_34, %c0_35, %c0_36] : memref<3x128x128xf32, #tpu.memory_space<vmem>>, vector<1x128x128xf32>
    %70 = vector.shape_cast %69 : vector<1x128x128xf32> to vector<128x128xf32>
    %cst_37 = arith.constant dense<0.000000e+00> : vector<32x128xf32>
    %71 = tpu.matmul %68, %70, %cst_37 {dimension_numbers = #tpu.dot_dimension_numbers<[1], [0], [0], [1], [0, 0, 1, 1], [], []>} : vector<32x128xf32>, vector<128x128xf32>, vector<32x128xf32> -> vector<32x128xf32>
    %72 = arith.addf %61, %71 : vector<32x128xf32>
    %c0_38 = arith.constant 0 : index
    %c0_39 = arith.constant 0 : index
    %73 = vector.load %arg4[%c0_38, %c0_39] : memref<1x128xf32, #tpu.memory_space<vmem>>, vector<1x128xf32>
    %74 = vector.broadcast %73 : vector<1x128xf32> to vector<32x128xf32>
    %75 = arith.addf %72, %74 : vector<32x128xf32>
    %c0_40 = arith.constant 0 : index
    %c0_41 = arith.constant 0 : index
    %76 = vector.load %arg5[%c0_40, %c0_41] : memref<32x128xf32, #tpu.memory_space<vmem>>, vector<32x128xf32>
    tpu.vector_store %arg5[%c0_40, %c0_41], %45 {strides = array<i32>} : memref<32x128xf32, #tpu.memory_space<vmem>>, vector<32x128xf32>,
    %c0_42 = arith.constant 0 : index
    %c0_43 = arith.constant 0 : index
    %77 = vector.load %arg6[%c0_42, %c0_43] : memref<32x128xf32, #tpu.memory_space<vmem>>, vector<32x128xf32>
    tpu.vector_store %arg6[%c0_42, %c0_43], %75 {strides = array<i32>} : memref<32x128xf32, #tpu.memory_space<vmem>>, vector<32x128xf32>,
    return
  }
}

</mosaic_0001>

<llo_original>
// kernel: _fused_forward.1
$region0: #{_fused_forward.1}
  #allocation0 [shape = 'u32[]', space=smem, size = 0x4, offset = 0x4, fixed_abs, tag = 'smem constant byte address 0x4 - core index']
  #allocation1 [shape = 'u32[144,128]{1,0:T(1,128)}', space=vmem, size = 0x12000, scoped, tag = 'internal scratch']
  %s0 = inlined_call_operand.vmem [shape: f32[32,64], index: 0, kind: input, shape index: {}]
  %s1 = inlined_call_operand.hbm [shape: f32[3,64,128], index: 1, kind: input, shape index: {}]
  %s2 = inlined_call_operand.vmem [shape: f32[1,128], index: 2, kind: input, shape index: {}]
  %s3 = inlined_call_operand.vmem [shape: f32[3,128,128], index: 3, kind: input, shape index: {}]
  %s4 = inlined_call_operand.vmem [shape: f32[1,128], index: 4, kind: input, shape index: {}]
  %s5 = inlined_call_operand.vmem [shape: f32[32,128], index: 5, kind: output, shape index: {0}]
  %s6 = inlined_call_operand.vmem [shape: f32[32,128], index: 6, kind: output, shape index: {1}]
  %7 = xla_tuple %s5, %s6
  %s8 = sld [smem:[#allocation0]]
  $region42: #{_fused_forward.1} parent=0
    _
  %s10 = ssub.s32 1, %s8
  %s11 = scalar_select 0, %s10, %s8
  $region1: #{_fused_forward.1} parent=0
    #allocation2 [shape = 'u8[98304]{0}', space=vmem, size = 0x18000, scoped, tag = 'input window, operand 1, single buffered']
    #allocation3 [shape = 's32[1]{0}', space=sflag, size = 0x4, scoped, tag = 'scoped memory for _fused_forward.1']
    %12 = vsyncpa [#allocation3], 0
    // Predicated region
    $region2: #{_fused_forward.1} parent=1 // pred_check
      _
    $region3: #{_fused_forward.1} parent=1 // pred_check_branch
      %14 = sbr.rel (0) target = $region5
    $region4: #{_fused_forward.1} parent=1 // pred_region
      _
    $region5: #{_fused_forward.1} parent=1 // pred_fallthru
      _
    // Predicated region
    $region6: #{_fused_forward.1} parent=1 // pred_check
      _
    $region7: #{_fused_forward.1} parent=1 // pred_check_branch
      %16 = sbr.rel (0) target = $region9
    $region8: #{_fused_forward.1} parent=1 // pred_region
      %s18 = ssub.s32 3072, 3072
      %19 = vsyncadd [#allocation3], %s18
      %s20 = sshll.u32 [#allocation2], 4
      %s21 = int_to_ptr.vmem [resolvable:$true] %s20
      %26 = dma.hbm_to_vmem [thread:$0]  %s1, 3072, %s21, [#allocation3], 128, 128, 8
    $region9: #{_fused_forward.1} parent=1 // pred_fallthru
      _
    // Predicated region
    $region10: #{_fused_forward.1} parent=1 // pred_check
      _
    $region11: #{_fused_forward.1} parent=1 // pred_check_branch
      %28 = sbr.rel (0) target = $region13
    $region12: #{_fused_forward.1} parent=1 // pred_region
      _
    $region13: #{_fused_forward.1} parent=1 // pred_fallthru
      _
    // Predicated region
    $region14: #{_fused_forward.1} parent=1 // pred_check
      _
    $region15: #{_fused_forward.1} parent=1 // pred_check_branch
      %30 = sbr.rel (0) target = $region17
    $region16: #{_fused_forward.1} parent=1 // pred_region
      _
    $region17: #{_fused_forward.1} parent=1 // pred_fallthru
      _
    // Predicated region
    $region18: #{_fused_forward.1} parent=1 // pred_check
      _
    $region19: #{_fused_forward.1} parent=1 // pred_check_branch
      %32 = sbr.rel (0) target = $region21
    $region20: #{_fused_forward.1} parent=1 // pred_region
      _
    $region21: #{_fused_forward.1} parent=1 // pred_fallthru
      _
    // Predicated region
    $region22: #{_fused_forward.1} parent=1 // pred_check
      _
    $region23: #{_fused_forward.1} parent=1 // pred_check_branch
      %34 = sbr.rel (0) target = $region25
    $region24: #{_fused_forward.1} parent=1 // pred_region
      %35 = dma.done [#allocation3], 3072
    $region25: #{_fused_forward.1} parent=1 // pred_fallthru
      _
    %v36 = vlaneseq
    %v37 = vshrl.u32 %v36, 7
    %v38 = vadd.s32 %v37, 8
    %v39 = vadd.s32 %v37, 16
    %v40 = vadd.s32 %v37, 24
    %vm41 = vcmp.lt.s32.totalorder %v37, 0
    %v42 = vsub.s32 0, %v37
    %v43 = vsel %vm41, %v42, %v37
    %v44 = vshrl.u32 %v43, 4
    %v45 = vand.u32 %v43, 15
    %v46 = vsub.s32 0, %v45
    %v47 = vsel %vm41, %v46, %v45
    %vm48 = vcmp.lt.s32.totalorder %v38, 0
    %v49 = vsub.s32 0, %v38
    %v50 = vsel %vm48, %v49, %v38
    %v51 = vshrl.u32 %v50, 4
    %v52 = vand.u32 %v50, 15
    %v53 = vsub.s32 0, %v52
    %v54 = vsel %vm48, %v53, %v52
    %vm55 = vcmp.lt.s32.totalorder %v39, 0
    %v56 = vsub.s32 0, %v39
    %v57 = vsel %vm55, %v56, %v39
    %v58 = vshrl.u32 %v57, 4
    %v59 = vand.u32 %v57, 15
    %v60 = vsub.s32 0, %v59
    %v61 = vsel %vm55, %v60, %v59
    %vm62 = vcmp.lt.s32.totalorder %v40, 0
    %v63 = vsub.s32 0, %v40
    %v64 = vsel %vm62, %v63, %v40
    %v65 = vshrl.u32 %v64, 4
    %v66 = vand.u32 %v64, 15
    %v67 = vsub.s32 0, %v66
    %v68 = vsel %vm62, %v67, %v66
    %vm69 = vcmp.ne.s32.totalorder %v47, 0
    %vm70 = vcmp.ne.s32.totalorder %v54, 0
    %vm71 = vcmp.ne.s32.totalorder %v61, 0
    %vm72 = vcmp.ne.s32.totalorder %v68, 0
    %vm73 = vcmp.lt.s32.totalorder %v47, 0
    %vm74 = vcmp.lt.s32.totalorder %v54, 0
    %vm75 = vcmp.lt.s32.totalorder %v61, 0
    %vm76 = vcmp.lt.s32.totalorder %v68, 0
    %vm77 = vmand %vm73, %vm69
    %vm78 = vmand %vm74, %vm70
    %vm79 = vmand %vm75, %vm71
    %vm80 = vmand %vm76, %vm72
    %v81 = vadd.s32 %v47, 16
    %v82 = vadd.s32 %v54, 16
    %v83 = vadd.s32 %v61, 16
    %v84 = vadd.s32 %v68, 16
    %v85 = vsel %vm77, %v81, %v47
    %v86 = vsel %vm78, %v82, %v54
    %v87 = vsel %vm79, %v83, %v61
    %v88 = vsel %vm80, %v84, %v68
    %v89 = vld [vmem:[%s0] sm:$0xff]
    %v90 = vld [vmem:[%s0 + $0x8] sm:$0xff]
    %v91 = vld [vmem:[%s0 + $0x10] sm:$0xff]
    %v92 = vld [vmem:[%s0 + $0x18] sm:$0xff]
    %s93 = scalar_lea.vmem [#allocation2], 64
    %v94 = vld [vmem:[%s93] sm:$0xff]
    %v95 = vld [vmem:[%s93 + $0x8] sm:$0xff]
    %v96 = vld [vmem:[%s93 + $0x10] sm:$0xff]
    %v97 = vld [vmem:[%s93 + $0x18] sm:$0xff]
    %v98 = vld [vmem:[%s93 + $0x20] sm:$0xff]
    %v99 = vld [vmem:[%s93 + $0x28] sm:$0xff]
    %v100 = vld [vmem:[%s93 + $0x30] sm:$0xff]
    %v101 = vld [vmem:[%s93 + $0x38] sm:$0xff]
    %v102 = vrot.slane %v89, 7
    %v103 = vrot.slane %v90, 7
    %v104 = vrot.slane %v91, 7
    %v105 = vrot.slane %v92, 7
    %vm106 = vcmp.lt.s32.totalorder %v37, 1
    %v107 = vsel %vm106, %v104, %v105
    %v108 = vsel %vm106, %v103, %v104
    %v109 = vsel %vm106, %v102, %v103
    %v110 = vsel %vm106, %v105, %v102
    %vm111 = vcmp.ge.s32.totalorder %v85, 1
    %vm112 = vcmp.ge.s32.totalorder %v86, 1
    %vm113 = vcmp.ge.s32.totalorder %v87, 1
    %vm114 = vcmp.ge.s32.totalorder %v88, 1
    %v115 = vsel %vm111, 1, 0
    %v116 = vsel %vm112, 1, 0
    %v117 = vsel %vm113, 1, 0
    %v118 = vsel %vm114, 1, 0
    %vm119 = vcmp.eq.s32.totalorder %v115, 1
    %vm120 = vcmp.eq.s32.totalorder %v116, 1
    %vm121 = vcmp.eq.s32.totalorder %v117, 1
    %vm122 = vcmp.eq.s32.totalorder %v118, 1
    %v123 = vsel %vm119, %v110, 0.0
    %v124 = vsel %vm120, %v109, 0.0
    %v125 = vsel %vm121, %v108, 0.0
    %v126 = vsel %vm122, %v107, 0.0
    %v127 = vld [vmem:[#allocation2] sm:$0xff]
    %v128 = vld [vmem:[#allocation2 + $0x8] sm:$0xff]
    %v129 = vld [vmem:[#allocation2 + $0x10] sm:$0xff]
    %v130 = vld [vmem:[#allocation2 + $0x18] sm:$0xff]
    %v131 = vld [vmem:[#allocation2 + $0x20] sm:$0xff]
    %v132 = vld [vmem:[#allocation2 + $0x28] sm:$0xff]
    %v133 = vld [vmem:[#allocation2 + $0x30] sm:$0xff]
    %v134 = vld [vmem:[#allocation2 + $0x38] sm:$0xff]
    %vm135 = vcmask 523264
    %v137 = vsel %vm135, %v123, 0
    %v140 = vsel %vm135, %v124, 0
    %v143 = vsel %vm135, %v125, 0
    %v146 = vsel %vm135, %v126, 0
    %148 = vmatprep.subr.mxu0 0.0
    %149 = vmatpush1.msra.mxu0 %v127
    %150 = vmatprep.subr.mxu0 0.0
    %151 = vmatpush1.msra.mxu0 %v128
    %152 = vmatprep.subr.mxu0 0.0
    %153 = vmatpush1.msra.mxu0 %v129
    %154 = vmatprep.subr.mxu0 0.0
    %155 = vmatpush1.msra.mxu0 %v130
    %156 = vmatprep.subr.mxu0 0.0
    %157 = vmatpush1.msra.mxu0 %v131
    %158 = vmatprep.subr.mxu0 0.0
    %159 = vmatpush1.msra.mxu0 %v132
    %160 = vmatprep.subr.mxu0 0.0
    %161 = vmatpush1.msra.mxu0 %v133
    %162 = vmatprep.subr.mxu0 0.0
    %163 = vmatpush1.msra.mxu0 %v134
    %164 = vmatprep.subr.mxu0 0.0
    %165 = vmatpush1.msra.mxu0 0.0
    %166 = vmatprep.subr.mxu0 0.0
    %167 = vmatpush1.msra.mxu0 0.0
    %168 = vmatprep.subr.mxu0 0.0
    %169 = vmatpush1.msra.mxu0 0.0
    %170 = vmatprep.subr.mxu0 0.0
    %171 = vmatpush1.msra.mxu0 0.0
    %172 = vmatprep.subr.mxu0 0.0
    %173 = vmatpush1.msra.mxu0 0.0
    %174 = vmatprep.subr.mxu0 0.0
    %175 = vmatpush1.msra.mxu0 0.0
    %176 = vmatprep.subr.mxu0 0.0
    %177 = vmatpush1.msra.mxu0 0.0
    %178 = vmatprep.subr.mxu0 0.0
    %179 = vmatpush1.msra.mxu0 0.0
    %180 = vmatprep.subr.mxu0 0.0
    %181 = vmatpush1.msra.mxu0 0.0
    %182 = vmatprep.subr.mxu0 0.0
    %183 = vmatpush1.msra.mxu0 0.0
    %184 = vmatprep.subr.mxu0 0.0
    %185 = vmatpush1.msra.mxu0 0.0
    %186 = vmatprep.subr.mxu0 0.0
    %187 = vmatpush1.msra.mxu0 0.0
    %188 = vmatprep.subr.mxu0 0.0
    %189 = vmatpush1.msra.mxu0 0.0
    %190 = vmatprep.subr.mxu0 0.0
    %191 = vmatpush1.msra.mxu0 0.0
    %192 = vmatprep.subr.mxu0 0.0
    %193 = vmatpush1.msra.mxu0 0.0
    %194 = vmatprep.subr.mxu0 0.0
    %195 = vmatpush1.msra.mxu0 0.0
    %196 = vmatprep.subr.mxu0 0.0
    %197 = vmatpush1.msra.mxu0 0.0
    %198 = vmatprep.subr.mxu0 0.0
    %199 = vmatpush1.msra.mxu0 0.0
    %200 = vmatprep.subr.mxu0 0.0
    %201 = vmatpush1.msra.mxu0 0.0
    %202 = vmatprep.subr.mxu0 0.0
    %203 = vmatpush1.msra.mxu0 0.0
    %204 = vmatprep.subr.mxu0 0.0
    %205 = vmatpush1.msra.mxu0 0.0
    %206 = vmatprep.subr.mxu0 0.0
    %207 = vmatpush1.msra.mxu0 0.0
    %208 = vmatprep.subr.mxu0 0.0
    %209 = vmatpush1.msra.mxu0 0.0
    %210 = vmatprep.subr.mxu0 0.0
    %211 = vmatpush1.msra.mxu0 0.0
    %212 = vmatprep.mubr.f32.mxu0 0.0
    %213 = vmatmul.mubr.f32.gmra.mrb[0].mxu0 %v137
    %v214 = vpop.f32.mrb[0].mxu0
    %v215 = vadd.f32 0.0, %v214
    %v216 = vpop.f32.mrb[0].mxu0
    %217 = vmatprep.mubr.f32.mxu0 0.0
    %218 = vmatmul.mubr.f32.gmra.mrb[0].mxu0 %v140
    %v219 = vpop.f32.mrb[0].mxu0
    %v220 = vadd.f32 0.0, %v219
    %v221 = vpop.f32.mrb[0].mxu0
    %222 = vmatprep.mubr.f32.mxu0 0.0
    %223 = vmatmul.mubr.f32.gmra.mrb[0].mxu0 %v143
    %v224 = vpop.f32.mrb[0].mxu0
    %v225 = vadd.f32 0.0, %v224
    %v226 = vpop.f32.mrb[0].mxu0
    %227 = vmatprep.mubr.f32.mxu0 0.0
    %228 = vmatmul.mubr.f32.gmra.mrb[0].mxu0 %v146
    %v229 = vpop.f32.mrb[0].mxu0
    %v230 = vadd.f32 0.0, %v229
    %v231 = vpop.f32.mrb[0].mxu0
    %232 = vdwg.mxu0
    %v234 = vsel %vm135, %v89, 0
    %v237 = vsel %vm135, %v90, 0
    %v240 = vsel %vm135, %v91, 0
    %v243 = vsel %vm135, %v92, 0
    %245 = vmatprep.subr.mxu0 0.0
    %246 = vmatpush1.msra.mxu0 %v94
    %247 = vmatprep.subr.mxu0 0.0
    %248 = vmatpush1.msra.mxu0 %v95
    %249 = vmatprep.subr.mxu0 0.0
    %250 = vmatpush1.msra.mxu0 %v96
    %251 = vmatprep.subr.mxu0 0.0
    %252 = vmatpush1.msra.mxu0 %v97
    %253 = vmatprep.subr.mxu0 0.0
    %254 = vmatpush1.msra.mxu0 %v98
    %255 = vmatprep.subr.mxu0 0.0
    %256 = vmatpush1.msra.mxu0 %v99
    %257 = vmatprep.subr.mxu0 0.0
    %258 = vmatpush1.msra.mxu0 %v100
    %259 = vmatprep.subr.mxu0 0.0
    %260 = vmatpush1.msra.mxu0 %v101
    %261 = vmatprep.subr.mxu0 0.0
    %262 = vmatpush1.msra.mxu0 0.0
    %263 = vmatprep.subr.mxu0 0.0
    %264 = vmatpush1.msra.mxu0 0.0
    %265 = vmatprep.subr.mxu0 0.0
    %266 = vmatpush1.msra.mxu0 0.0
    %267 = vmatprep.subr.mxu0 0.0
    %268 = vmatpush1.msra.mxu0 0.0
    %269 = vmatprep.subr.mxu0 0.0
    %270 = vmatpush1.msra.mxu0 0.0
    %271 = vmatprep.subr.mxu0 0.0
    %272 = vmatpush1.msra.mxu0 0.0
    %273 = vmatprep.subr.mxu0 0.0
    %274 = vmatpush1.msra.mxu0 0.0
    %275 = vmatprep.subr.mxu0 0.0
    %276 = vmatpush1.msra.mxu0 0.0
    %277 = vmatprep.subr.mxu0 0.0
    %278 = vmatpush1.msra.mxu0 0.0
    %279 = vmatprep.subr.mxu0 0.0
    %280 = vmatpush1.msra.mxu0 0.0
    %281 = vmatprep.subr.mxu0 0.0
    %282 = vmatpush1.msra.mxu0 0.0
    %283 = vmatprep.subr.mxu0 0.0
    %284 = vmatpush1.msra.mxu0 0.0
    %285 = vmatprep.subr.mxu0 0.0
    %286 = vmatpush1.msra.mxu0 0.0
    %287 = vmatprep.subr.mxu0 0.0
    %288 = vmatpush1.msra.mxu0 0.0
    %289 = vmatprep.subr.mxu0 0.0
    %290 = vmatpush1.msra.mxu0 0.0
    %291 = vmatprep.subr.mxu0 0.0
    %292 = vmatpush1.msra.mxu0 0.0
    %293 = vmatprep.subr.mxu0 0.0
    %294 = vmatpush1.msra.mxu0 0.0
    %295 = vmatprep.subr.mxu0 0.0
    %296 = vmatpush1.msra.mxu0 0.0
    %297 = vmatprep.subr.mxu0 0.0
    %298 = vmatpush1.msra.mxu0 0.0
    %299 = vmatprep.subr.mxu0 0.0
    %300 = vmatpush1.msra.mxu0 0.0
    %301 = vmatprep.subr.mxu0 0.0
    %302 = vmatpush1.msra.mxu0 0.0
    %303 = vmatprep.subr.mxu0 0.0
    %304 = vmatpush1.msra.mxu0 0.0
    %305 = vmatprep.subr.mxu0 0.0
    %306 = vmatpush1.msra.mxu0 0.0
    %307 = vmatprep.subr.mxu0 0.0
    %308 = vmatpush1.msra.mxu0 0.0
    %309 = vmatprep.mubr.f32.mxu0 0.0
    %310 = vmatmul.mubr.f32.gmra.mrb[0].mxu0 %v234
    %v311 = vpop.f32.mrb[0].mxu0
    %v312 = vadd.f32 %v215, %v311
    %v313 = vpop.f32.mrb[0].mxu0
    %314 = vmatprep.mubr.f32.mxu0 0.0
    %315 = vmatmul.mubr.f32.gmra.mrb[0].mxu0 %v237
    %v316 = vpop.f32.mrb[0].mxu0
    %v317 = vadd.f32 %v220, %v316
    %v318 = vpop.f32.mrb[0].mxu0
    %319 = vmatprep.mubr.f32.mxu0 0.0
    %320 = vmatmul.mubr.f32.gmra.mrb[0].mxu0 %v240
    %v321 = vpop.f32.mrb[0].mxu0
    %v322 = vadd.f32 %v225, %v321
    %v323 = vpop.f32.mrb[0].mxu0
    %324 = vmatprep.mubr.f32.mxu0 0.0
    %325 = vmatmul.mubr.f32.gmra.mrb[0].mxu0 %v243
    %v326 = vpop.f32.mrb[0].mxu0
    %v327 = vadd.f32 %v230, %v326
    %v328 = vpop.f32.mrb[0].mxu0
    %329 = vdwg.mxu0
    %v330 = vrot.slane %v89, 1
    %v331 = vrot.slane %v90, 1
    %v332 = vrot.slane %v91, 1
    %v333 = vrot.slane %v92, 1
    %vm334 = vcmp.lt.s32.totalorder %v37, 7
    %v335 = vsel %vm334, %v332, %v333
    %v336 = vsel %vm334, %v331, %v332
    %v337 = vsel %vm334, %v330, %v331
    %v338 = vsel %vm334, %v333, %v330
    %vm339 = vcmp.le.s32.totalorder %v85, 14
    %vm340 = vcmp.le.s32.totalorder %v86, 14
    %vm341 = vcmp.le.s32.totalorder %v87, 14
    %vm342 = vcmp.le.s32.totalorder %v88, 14
    %v343 = vsel %vm339, 1, 0
    %v344 = vsel %vm340, 1, 0
    %v345 = vsel %vm341, 1, 0
    %v346 = vsel %vm342, 1, 0
    %vm347 = vcmp.eq.s32.totalorder %v343, 1
    %vm348 = vcmp.eq.s32.totalorder %v344, 1
    %vm349 = vcmp.eq.s32.totalorder %v345, 1
    %vm350 = vcmp.eq.s32.totalorder %v346, 1
    %v351 = vsel %vm347, %v337, 0.0
    %v352 = vsel %vm348, %v336, 0.0
    %v353 = vsel %vm349, %v335, 0.0
    %v354 = vsel %vm350, %v338, 0.0
    %s355 = scalar_lea.vmem [#allocation2], 128
    %v356 = vld [vmem:[%s355] sm:$0xff]
    %v357 = vld [vmem:[%s355 + $0x8] sm:$0xff]
    %v358 = vld [vmem:[%s355 + $0x10] sm:$0xff]
    %v359 = vld [vmem:[%s355 + $0x18] sm:$0xff]
    %v360 = vld [vmem:[%s355 + $0x20] sm:$0xff]
    %v361 = vld [vmem:[%s355 + $0x28] sm:$0xff]
    %v362 = vld [vmem:[%s355 + $0x30] sm:$0xff]
    %v363 = vld [vmem:[%s355 + $0x38] sm:$0xff]
    %v365 = vsel %vm135, %v351, 0
    %v368 = vsel %vm135, %v352, 0
    %v371 = vsel %vm135, %v353, 0
    %v374 = vsel %vm135, %v354, 0
    %376 = vmatprep.subr.mxu0 0.0
    %377 = vmatpush1.msra.mxu0 %v356
    %378 = vmatprep.subr.mxu0 0.0
    %379 = vmatpush1.msra.mxu0 %v357
    %380 = vmatprep.subr.mxu0 0.0
    %381 = vmatpush1.msra.mxu0 %v358
    %382 = vmatprep.subr.mxu0 0.0
    %383 = vmatpush1.msra.mxu0 %v359
    %384 = vmatprep.subr.mxu0 0.0
    %385 = vmatpush1.msra.mxu0 %v360
    %386 = vmatprep.subr.mxu0 0.0
    %387 = vmatpush1.msra.mxu0 %v361
    %388 = vmatprep.subr.mxu0 0.0
    %389 = vmatpush1.msra.mxu0 %v362
    %390 = vmatprep.subr.mxu0 0.0
    %391 = vmatpush1.msra.mxu0 %v363
    %392 = vmatprep.subr.mxu0 0.0
    %393 = vmatpush1.msra.mxu0 0.0
    %394 = vmatprep.subr.mxu0 0.0
    %395 = vmatpush1.msra.mxu0 0.0
    %396 = vmatprep.subr.mxu0 0.0
    %397 = vmatpush1.msra.mxu0 0.0
    %398 = vmatprep.subr.mxu0 0.0
    %399 = vmatpush1.msra.mxu0 0.0
    %400 = vmatprep.subr.mxu0 0.0
    %401 = vmatpush1.msra.mxu0 0.0
    %402 = vmatprep.subr.mxu0 0.0
    %403 = vmatpush1.msra.mxu0 0.0
    %404 = vmatprep.subr.mxu0 0.0
    %405 = vmatpush1.msra.mxu0 0.0
    %406 = vmatprep.subr.mxu0 0.0
    %407 = vmatpush1.msra.mxu0 0.0
    %408 = vmatprep.subr.mxu0 0.0
    %409 = vmatpush1.msra.mxu0 0.0
    %410 = vmatprep.subr.mxu0 0.0
    %411 = vmatpush1.msra.mxu0 0.0
    %412 = vmatprep.subr.mxu0 0.0
    %413 = vmatpush1.msra.mxu0 0.0
    %414 = vmatprep.subr.mxu0 0.0
    %415 = vmatpush1.msra.mxu0 0.0
    %416 = vmatprep.subr.mxu0 0.0
    %417 = vmatpush1.msra.mxu0 0.0
    %418 = vmatprep.subr.mxu0 0.0
    %419 = vmatpush1.msra.mxu0 0.0
    %420 = vmatprep.subr.mxu0 0.0
    %421 = vmatpush1.msra.mxu0 0.0
    %422 = vmatprep.subr.mxu0 0.0
    %423 = vmatpush1.msra.mxu0 0.0
    %424 = vmatprep.subr.mxu0 0.0
    %425 = vmatpush1.msra.mxu0 0.0
    %426 = vmatprep.subr.mxu0 0.0
    %427 = vmatpush1.msra.mxu0 0.0
    %428 = vmatprep.subr.mxu0 0.0
    %429 = vmatpush1.msra.mxu0 0.0
    %430 = vmatprep.subr.mxu0 0.0
    %431 = vmatpush1.msra.mxu0 0.0
    %432 = vmatprep.subr.mxu0 0.0
    %433 = vmatpush1.msra.mxu0 0.0
    %434 = vmatprep.subr.mxu0 0.0
    %435 = vmatpush1.msra.mxu0 0.0
    %436 = vmatprep.subr.mxu0 0.0
    %437 = vmatpush1.msra.mxu0 0.0
    %438 = vmatprep.subr.mxu0 0.0
    %439 = vmatpush1.msra.mxu0 0.0
    %440 = vmatprep.mubr.f32.mxu0 0.0
    %441 = vmatmul.mubr.f32.gmra.mrb[0].mxu0 %v365
    %v442 = vpop.f32.mrb[0].mxu0
    %v443 = vadd.f32 0.0, %v442
    %v444 = vpop.f32.mrb[0].mxu0
    %445 = vmatprep.mubr.f32.mxu0 0.0
    %446 = vmatmul.mubr.f32.gmra.mrb[0].mxu0 %v368
    %v447 = vpop.f32.mrb[0].mxu0
    %v448 = vadd.f32 0.0, %v447
    %v449 = vpop.f32.mrb[0].mxu0
    %450 = vmatprep.mubr.f32.mxu0 0.0
    %451 = vmatmul.mubr.f32.gmra.mrb[0].mxu0 %v371
    %v452 = vpop.f32.mrb[0].mxu0
    %v453 = vadd.f32 0.0, %v452
    %v454 = vpop.f32.mrb[0].mxu0
    %455 = vmatprep.mubr.f32.mxu0 0.0
    %456 = vmatmul.mubr.f32.gmra.mrb[0].mxu0 %v374
    %v457 = vpop.f32.mrb[0].mxu0
    %v458 = vadd.f32 0.0, %v457
    %v459 = vpop.f32.mrb[0].mxu0
    %460 = vdwg.mxu0
    %v461 = vadd.f32 %v312, %v443
    %v462 = vadd.f32 %v317, %v448
    %v463 = vadd.f32 %v322, %v453
    %v464 = vadd.f32 %v327, %v458
    %v465 = vld [vmem:[%s2] sm:$0x1]
    %v467 = vlaneseq
    %v468 = vshrl.u32 %v467, 7
    %v469 = vsub.s32 0, %v468
    %v470 = vrot.slane %v465, %v469
    %v472 = vadd.f32 %v461, %v470
    %v473 = vadd.f32 %v462, %v470
    %v474 = vadd.f32 %v463, %v470
    %v475 = vadd.f32 %v464, %v470
    %v476 = vmax.f32 %v472, 0.0
    %v477 = vmax.f32 %v473, 0.0
    %v478 = vmax.f32 %v474, 0.0
    %v479 = vmax.f32 %v475, 0.0
    %s480 = scalar_lea.vmem %s3, 128
    %v481 = vld [vmem:[%s480] sm:$0xff]
    %v482 = vld [vmem:[%s480 + $0x8] sm:$0xff]
    %v483 = vld [vmem:[%s480 + $0x10] sm:$0xff]
    %v484 = vld [vmem:[%s480 + $0x18] sm:$0xff]
    %v485 = vld [vmem:[%s480 + $0x20] sm:$0xff]
    %v486 = vld [vmem:[%s480 + $0x28] sm:$0xff]
    %v487 = vld [vmem:[%s480 + $0x30] sm:$0xff]
    %v488 = vld [vmem:[%s480 + $0x38] sm:$0xff]
    %v489 = vld [vmem:[%s480 + $0x40] sm:$0xff]
    %v490 = vld [vmem:[%s480 + $0x48] sm:$0xff]
    %v491 = vld [vmem:[%s480 + $0x50] sm:$0xff]
    %v492 = vld [vmem:[%s480 + $0x58] sm:$0xff]
    %v493 = vld [vmem:[%s480 + $0x60] sm:$0xff]
    %v494 = vld [vmem:[%s480 + $0x68] sm:$0xff]
    %v495 = vld [vmem:[%s480 + $0x70] sm:$0xff]
    %v496 = vld [vmem:[%s480 + $0x78] sm:$0xff]
    %v497 = vrot.slane %v476, 7
    %v498 = vrot.slane %v477, 7
    %v499 = vrot.slane %v478, 7
    %v500 = vrot.slane %v479, 7
    %v501 = vsel %vm106, %v499, %v500
    %v502 = vsel %vm106, %v498, %v499
    %v503 = vsel %vm106, %v497, %v498
    %v504 = vsel %vm106, %v500, %v497
    %v505 = vsel %vm119, %v504, 0.0
    %v506 = vsel %vm120, %v503, 0.0
    %v507 = vsel %vm121, %v502, 0.0
    %v508 = vsel %vm122, %v501, 0.0
    %v509 = vld [vmem:[%s3] sm:$0xff]
    %v510 = vld [vmem:[%s3 + $0x8] sm:$0xff]
    %v511 = vld [vmem:[%s3 + $0x10] sm:$0xff]
    %v512 = vld [vmem:[%s3 + $0x18] sm:$0xff]
    %v513 = vld [vmem:[%s3 + $0x20] sm:$0xff]
    %v514 = vld [vmem:[%s3 + $0x28] sm:$0xff]
    %v515 = vld [vmem:[%s3 + $0x30] sm:$0xff]
    %v516 = vld [vmem:[%s3 + $0x38] sm:$0xff]
    %v517 = vld [vmem:[%s3 + $0x40] sm:$0xff]
    %v518 = vld [vmem:[%s3 + $0x48] sm:$0xff]
    %v519 = vld [vmem:[%s3 + $0x50] sm:$0xff]
    %v520 = vld [vmem:[%s3 + $0x58] sm:$0xff]
    %v521 = vld [vmem:[%s3 + $0x60] sm:$0xff]
    %v522 = vld [vmem:[%s3 + $0x68] sm:$0xff]
    %v523 = vld [vmem:[%s3 + $0x70] sm:$0xff]
    %v524 = vld [vmem:[%s3 + $0x78] sm:$0xff]
    %525 = vmatprep.subr.mxu0 0.0
    %526 = vmatpush1.msra.mxu0 %v509
    %527 = vmatprep.subr.mxu0 0.0
    %528 = vmatpush1.msra.mxu0 %v510
    %529 = vmatprep.subr.mxu0 0.0
    %530 = vmatpush1.msra.mxu0 %v511
    %531 = vmatprep.subr.mxu0 0.0
    %532 = vmatpush1.msra.mxu0 %v512
    %533 = vmatprep.subr.mxu0 0.0
    %534 = vmatpush1.msra.mxu0 %v513
    %535 = vmatprep.subr.mxu0 0.0
    %536 = vmatpush1.msra.mxu0 %v514
    %537 = vmatprep.subr.mxu0 0.0
    %538 = vmatpush1.msra.mxu0 %v515
    %539 = vmatprep.subr.mxu0 0.0
    %540 = vmatpush1.msra.mxu0 %v516
    %541 = vmatprep.subr.mxu0 0.0
    %542 = vmatpush1.msra.mxu0 %v517
    %543 = vmatprep.subr.mxu0 0.0
    %544 = vmatpush1.msra.mxu0 %v518
    %545 = vmatprep.subr.mxu0 0.0
    %546 = vmatpush1.msra.mxu0 %v519
    %547 = vmatprep.subr.mxu0 0.0
    %548 = vmatpush1.msra.mxu0 %v520
    %549 = vmatprep.subr.mxu0 0.0
    %550 = vmatpush1.msra.mxu0 %v521
    %551 = vmatprep.subr.mxu0 0.0
    %552 = vmatpush1.msra.mxu0 %v522
    %553 = vmatprep.subr.mxu0 0.0
    %554 = vmatpush1.msra.mxu0 %v523
    %555 = vmatprep.subr.mxu0 0.0
    %556 = vmatpush1.msra.mxu0 %v524
    %557 = vmatprep.subr.mxu0 0.0
    %558 = vmatpush1.msra.mxu0 0.0
    %559 = vmatprep.subr.mxu0 0.0
    %560 = vmatpush1.msra.mxu0 0.0
    %561 = vmatprep.subr.mxu0 0.0
    %562 = vmatpush1.msra.mxu0 0.0
    %563 = vmatprep.subr.mxu0 0.0
    %564 = vmatpush1.msra.mxu0 0.0
    %565 = vmatprep.subr.mxu0 0.0
    %566 = vmatpush1.msra.mxu0 0.0
    %567 = vmatprep.subr.mxu0 0.0
    %568 = vmatpush1.msra.mxu0 0.0
    %569 = vmatprep.subr.mxu0 0.0
    %570 = vmatpush1.msra.mxu0 0.0
    %571 = vmatprep.subr.mxu0 0.0
    %572 = vmatpush1.msra.mxu0 0.0
    %573 = vmatprep.subr.mxu0 0.0
    %574 = vmatpush1.msra.mxu0 0.0
    %575 = vmatprep.subr.mxu0 0.0
    %576 = vmatpush1.msra.mxu0 0.0
    %577 = vmatprep.subr.mxu0 0.0
    %578 = vmatpush1.msra.mxu0 0.0
    %579 = vmatprep.subr.mxu0 0.0
    %580 = vmatpush1.msra.mxu0 0.0
    %581 = vmatprep.subr.mxu0 0.0
    %582 = vmatpush1.msra.mxu0 0.0
    %583 = vmatprep.subr.mxu0 0.0
    %584 = vmatpush1.msra.mxu0 0.0
    %585 = vmatprep.subr.mxu0 0.0
    %586 = vmatpush1.msra.mxu0 0.0
    %587 = vmatprep.subr.mxu0 0.0
    %588 = vmatpush1.msra.mxu0 0.0
    %589 = vmatprep.mubr.f32.mxu0 0.0
    %590 = vmatmul.mubr.f32.gmra.mrb[0].mxu0 %v505
    %v591 = vpop.f32.mrb[0].mxu0
    %v592 = vadd.f32 0.0, %v591
    %v593 = vpop.f32.mrb[0].mxu0
    %594 = vmatprep.mubr.f32.mxu0 0.0
    %595 = vmatmul.mubr.f32.gmra.mrb[0].mxu0 %v506
    %v596 = vpop.f32.mrb[0].mxu0
    %v597 = vadd.f32 0.0, %v596
    %v598 = vpop.f32.mrb[0].mxu0
    %599 = vmatprep.mubr.f32.mxu0 0.0
    %600 = vmatmul.mubr.f32.gmra.mrb[0].mxu0 %v507
    %v601 = vpop.f32.mrb[0].mxu0
    %v602 = vadd.f32 0.0, %v601
    %v603 = vpop.f32.mrb[0].mxu0
    %604 = vmatprep.mubr.f32.mxu0 0.0
    %605 = vmatmul.mubr.f32.gmra.mrb[0].mxu0 %v508
    %v606 = vpop.f32.mrb[0].mxu0
    %v607 = vadd.f32 0.0, %v606
    %v608 = vpop.f32.mrb[0].mxu0
    %609 = vdwg.mxu0
    %610 = vmatprep.subr.mxu0 0.0
    %611 = vmatpush1.msra.mxu0 %v481
    %612 = vmatprep.subr.mxu0 0.0
    %613 = vmatpush1.msra.mxu0 %v482
    %614 = vmatprep.subr.mxu0 0.0
    %615 = vmatpush1.msra.mxu0 %v483
    %616 = vmatprep.subr.mxu0 0.0
    %617 = vmatpush1.msra.mxu0 %v484
    %618 = vmatprep.subr.mxu0 0.0
    %619 = vmatpush1.msra.mxu0 %v485
    %620 = vmatprep.subr.mxu0 0.0
    %621 = vmatpush1.msra.mxu0 %v486
    %622 = vmatprep.subr.mxu0 0.0
    %623 = vmatpush1.msra.mxu0 %v487
    %624 = vmatprep.subr.mxu0 0.0
    %625 = vmatpush1.msra.mxu0 %v488
    %626 = vmatprep.subr.mxu0 0.0
    %627 = vmatpush1.msra.mxu0 %v489
    %628 = vmatprep.subr.mxu0 0.0
    %629 = vmatpush1.msra.mxu0 %v490
    %630 = vmatprep.subr.mxu0 0.0
    %631 = vmatpush1.msra.mxu0 %v491
    %632 = vmatprep.subr.mxu0 0.0
    %633 = vmatpush1.msra.mxu0 %v492
    %634 = vmatprep.subr.mxu0 0.0
    %635 = vmatpush1.msra.mxu0 %v493
    %636 = vmatprep.subr.mxu0 0.0
    %637 = vmatpush1.msra.mxu0 %v494
    %638 = vmatprep.subr.mxu0 0.0
    %639 = vmatpush1.msra.mxu0 %v495
    %640 = vmatprep.subr.mxu0 0.0
    %641 = vmatpush1.msra.mxu0 %v496
    %642 = vmatprep.subr.mxu0 0.0
    %643 = vmatpush1.msra.mxu0 0.0
    %644 = vmatprep.subr.mxu0 0.0
    %645 = vmatpush1.msra.mxu0 0.0
    %646 = vmatprep.subr.mxu0 0.0
    %647 = vmatpush1.msra.mxu0 0.0
    %648 = vmatprep.subr.mxu0 0.0
    %649 = vmatpush1.msra.mxu0 0.0
    %650 = vmatprep.subr.mxu0 0.0
    %651 = vmatpush1.msra.mxu0 0.0
    %652 = vmatprep.subr.mxu0 0.0
    %653 = vmatpush1.msra.mxu0 0.0
    %654 = vmatprep.subr.mxu0 0.0
    %655 = vmatpush1.msra.mxu0 0.0
    %656 = vmatprep.subr.mxu0 0.0
    %657 = vmatpush1.msra.mxu0 0.0
    %658 = vmatprep.subr.mxu0 0.0
    %659 = vmatpush1.msra.mxu0 0.0
    %660 = vmatprep.subr.mxu0 0.0
    %661 = vmatpush1.msra.mxu0 0.0
    %662 = vmatprep.subr.mxu0 0.0
    %663 = vmatpush1.msra.mxu0 0.0
    %664 = vmatprep.subr.mxu0 0.0
    %665 = vmatpush1.msra.mxu0 0.0
    %666 = vmatprep.subr.mxu0 0.0
    %667 = vmatpush1.msra.mxu0 0.0
    %668 = vmatprep.subr.mxu0 0.0
    %669 = vmatpush1.msra.mxu0 0.0
    %670 = vmatprep.subr.mxu0 0.0
    %671 = vmatpush1.msra.mxu0 0.0
    %672 = vmatprep.subr.mxu0 0.0
    %673 = vmatpush1.msra.mxu0 0.0
    %674 = vmatprep.mubr.f32.mxu0 0.0
    %675 = vmatmul.mubr.f32.gmra.mrb[0].mxu0 %v476
    %v676 = vpop.f32.mrb[0].mxu0
    %v677 = vadd.f32 %v592, %v676
    %v678 = vpop.f32.mrb[0].mxu0
    %679 = vmatprep.mubr.f32.mxu0 0.0
    %680 = vmatmul.mubr.f32.gmra.mrb[0].mxu0 %v477
    %v681 = vpop.f32.mrb[0].mxu0
    %v682 = vadd.f32 %v597, %v681
    %v683 = vpop.f32.mrb[0].mxu0
    %684 = vmatprep.mubr.f32.mxu0 0.0
    %685 = vmatmul.mubr.f32.gmra.mrb[0].mxu0 %v478
    %v686 = vpop.f32.mrb[0].mxu0
    %v687 = vadd.f32 %v602, %v686
    %v688 = vpop.f32.mrb[0].mxu0
    %689 = vmatprep.mubr.f32.mxu0 0.0
    %690 = vmatmul.mubr.f32.gmra.mrb[0].mxu0 %v479
    %v691 = vpop.f32.mrb[0].mxu0
    %v692 = vadd.f32 %v607, %v691
    %v693 = vpop.f32.mrb[0].mxu0
    %694 = vdwg.mxu0
    %v695 = vrot.slane %v476, 1
    %v696 = vrot.slane %v477, 1
    %v697 = vrot.slane %v478, 1
    %v698 = vrot.slane %v479, 1
    %v699 = vsel %vm334, %v697, %v698
    %v700 = vsel %vm334, %v696, %v697
    %v701 = vsel %vm334, %v695, %v696
    %v702 = vsel %vm334, %v698, %v695
    %v703 = vsel %vm347, %v701, 0.0
    %v704 = vsel %vm348, %v700, 0.0
    %v705 = vsel %vm349, %v699, 0.0
    %v706 = vsel %vm350, %v702, 0.0
    %s707 = scalar_lea.vmem %s3, 256
    %v708 = vld [vmem:[%s707] sm:$0xff]
    %v709 = vld [vmem:[%s707 + $0x8] sm:$0xff]
    %v710 = vld [vmem:[%s707 + $0x10] sm:$0xff]
    %v711 = vld [vmem:[%s707 + $0x18] sm:$0xff]
    %v712 = vld [vmem:[%s707 + $0x20] sm:$0xff]
    %v713 = vld [vmem:[%s707 + $0x28] sm:$0xff]
    %v714 = vld [vmem:[%s707 + $0x30] sm:$0xff]
    %v715 = vld [vmem:[%s707 + $0x38] sm:$0xff]
    %v716 = vld [vmem:[%s707 + $0x40] sm:$0xff]
    %v717 = vld [vmem:[%s707 + $0x48] sm:$0xff]
    %v718 = vld [vmem:[%s707 + $0x50] sm:$0xff]
    %v719 = vld [vmem:[%s707 + $0x58] sm:$0xff]
    %v720 = vld [vmem:[%s707 + $0x60] sm:$0xff]
    %v721 = vld [vmem:[%s707 + $0x68] sm:$0xff]
    %v722 = vld [vmem:[%s707 + $0x70] sm:$0xff]
    %v723 = vld [vmem:[%s707 + $0x78] sm:$0xff]
    %724 = vmatprep.subr.mxu0 0.0
    %725 = vmatpush1.msra.mxu0 %v708
    %726 = vmatprep.subr.mxu0 0.0
    %727 = vmatpush1.msra.mxu0 %v709
    %728 = vmatprep.subr.mxu0 0.0
    %729 = vmatpush1.msra.mxu0 %v710
    %730 = vmatprep.subr.mxu0 0.0
    %731 = vmatpush1.msra.mxu0 %v711
    %732 = vmatprep.subr.mxu0 0.0
    %733 = vmatpush1.msra.mxu0 %v712
    %734 = vmatprep.subr.mxu0 0.0
    %735 = vmatpush1.msra.mxu0 %v713
    %736 = vmatprep.subr.mxu0 0.0
    %737 = vmatpush1.msra.mxu0 %v714
    %738 = vmatprep.subr.mxu0 0.0
    %739 = vmatpush1.msra.mxu0 %v715
    %740 = vmatprep.subr.mxu0 0.0
    %741 = vmatpush1.msra.mxu0 %v716
    %742 = vmatprep.subr.mxu0 0.0
    %743 = vmatpush1.msra.mxu0 %v717
    %744 = vmatprep.subr.mxu0 0.0
    %745 = vmatpush1.msra.mxu0 %v718
    %746 = vmatprep.subr.mxu0 0.0
    %747 = vmatpush1.msra.mxu0 %v719
    %748 = vmatprep.subr.mxu0 0.0
    %749 = vmatpush1.msra.mxu0 %v720
    %750 = vmatprep.subr.mxu0 0.0
    %751 = vmatpush1.msra.mxu0 %v721
    %752 = vmatprep.subr.mxu0 0.0
    %753 = vmatpush1.msra.mxu0 %v722
    %754 = vmatprep.subr.mxu0 0.0
    %755 = vmatpush1.msra.mxu0 %v723
    %756 = vmatprep.subr.mxu0 0.0
    %757 = vmatpush1.msra.mxu0 0.0
    %758 = vmatprep.subr.mxu0 0.0
    %759 = vmatpush1.msra.mxu0 0.0
    %760 = vmatprep.subr.mxu0 0.0
    %761 = vmatpush1.msra.mxu0 0.0
    %762 = vmatprep.subr.mxu0 0.0
    %763 = vmatpush1.msra.mxu0 0.0
    %764 = vmatprep.subr.mxu0 0.0
    %765 = vmatpush1.msra.mxu0 0.0
    %766 = vmatprep.subr.mxu0 0.0
    %767 = vmatpush1.msra.mxu0 0.0
    %768 = vmatprep.subr.mxu0 0.0
    %769 = vmatpush1.msra.mxu0 0.0
    %770 = vmatprep.subr.mxu0 0.0
    %771 = vmatpush1.msra.mxu0 0.0
    %772 = vmatprep.subr.mxu0 0.0
    %773 = vmatpush1.msra.mxu0 0.0
    %774 = vmatprep.subr.mxu0 0.0
    %775 = vmatpush1.msra.mxu0 0.0
    %776 = vmatprep.subr.mxu0 0.0
    %777 = vmatpush1.msra.mxu0 0.0
    %778 = vmatprep.subr.mxu0 0.0
    %779 = vmatpush1.msra.mxu0 0.0
    %780 = vmatprep.subr.mxu0 0.0
    %781 = vmatpush1.msra.mxu0 0.0
    %782 = vmatprep.subr.mxu0 0.0
    %783 = vmatpush1.msra.mxu0 0.0
    %784 = vmatprep.subr.mxu0 0.0
    %785 = vmatpush1.msra.mxu0 0.0
    %786 = vmatprep.subr.mxu0 0.0
    %787 = vmatpush1.msra.mxu0 0.0
    %788 = vmatprep.mubr.f32.mxu0 0.0
    %789 = vmatmul.mubr.f32.gmra.mrb[0].mxu0 %v703
    %v790 = vpop.f32.mrb[0].mxu0
    %v791 = vadd.f32 0.0, %v790
    %v792 = vpop.f32.mrb[0].mxu0
    %793 = vmatprep.mubr.f32.mxu0 0.0
    %794 = vmatmul.mubr.f32.gmra.mrb[0].mxu0 %v704
    %v795 = vpop.f32.mrb[0].mxu0
    %v796 = vadd.f32 0.0, %v795
    %v797 = vpop.f32.mrb[0].mxu0
    %798 = vmatprep.mubr.f32.mxu0 0.0
    %799 = vmatmul.mubr.f32.gmra.mrb[0].mxu0 %v705
    %v800 = vpop.f32.mrb[0].mxu0
    %v801 = vadd.f32 0.0, %v800
    %v802 = vpop.f32.mrb[0].mxu0
    %803 = vmatprep.mubr.f32.mxu0 0.0
    %804 = vmatmul.mubr.f32.gmra.mrb[0].mxu0 %v706
    %v805 = vpop.f32.mrb[0].mxu0
    %v806 = vadd.f32 0.0, %v805
    %v807 = vpop.f32.mrb[0].mxu0
    %808 = vdwg.mxu0
    %v809 = vadd.f32 %v677, %v791
    %v810 = vadd.f32 %v682, %v796
    %v811 = vadd.f32 %v687, %v801
    %v812 = vadd.f32 %v692, %v806
    %v813 = vld [vmem:[%s4] sm:$0x1]
    %v815 = vlaneseq
    %v816 = vshrl.u32 %v815, 7
    %v817 = vsub.s32 0, %v816
    %v818 = vrot.slane %v813, %v817
    %v820 = vadd.f32 %v809, %v818
    %v821 = vadd.f32 %v810, %v818
    %v822 = vadd.f32 %v811, %v818
    %v823 = vadd.f32 %v812, %v818
    %824 = vst [vmem:[%s5] sm:$0xff] %v472
    %825 = vst [vmem:[%s5 + $0x8] sm:$0xff] %v473
    %826 = vst [vmem:[%s5 + $0x10] sm:$0xff] %v474
    %827 = vst [vmem:[%s5 + $0x18] sm:$0xff] %v475
    %828 = vst [vmem:[%s6] sm:$0xff] %v820
    %829 = vst [vmem:[%s6 + $0x8] sm:$0xff] %v821
    %830 = vst [vmem:[%s6 + $0x10] sm:$0xff] %v822
    %831 = vst [vmem:[%s6 + $0x18] sm:$0xff] %v823
    // Predicated region
    $region26: #{_fused_forward.1} parent=1 // pred_check
      _
    $region27: #{_fused_forward.1} parent=1 // pred_check_branch
      %833 = sbr.rel (0) target = $region29
    $region28: #{_fused_forward.1} parent=1 // pred_region
      _
    $region29: #{_fused_forward.1} parent=1 // pred_fallthru
      _
    // Predicated region
    $region30: #{_fused_forward.1} parent=1 // pred_check
      _
    $region31: #{_fused_forward.1} parent=1 // pred_check_branch
      %835 = sbr.rel (0) target = $region33
    $region32: #{_fused_forward.1} parent=1 // pred_region
      _
    $region33: #{_fused_forward.1} parent=1 // pred_fallthru
      _
    // Predicated region
    $region34: #{_fused_forward.1} parent=1 // pred_check
      _
    $region35: #{_fused_forward.1} parent=1 // pred_check_branch
      %837 = sbr.rel (0) target = $region37
    $region36: #{_fused_forward.1} parent=1 // pred_region
      _
    $region37: #{_fused_forward.1} parent=1 // pred_fallthru
      _
    // Predicated region
    $region38: #{_fused_forward.1} parent=1 // pred_check
      _
    $region39: #{_fused_forward.1} parent=1 // pred_check_branch
      %839 = sbr.rel (0) target = $region41
    $region40: #{_fused_forward.1} parent=1 // pred_region
      _
    $region41: #{_fused_forward.1} parent=1 // pred_fallthru
      _
    %840 = vsyncpa [#allocation3], 1

</llo_original>
